<compile_context>
chip_gen: v5e
topology: v5e:2x2
jax: 0.10.0
libtpu: 0.0.40
codegen_flags: <defaults>
</compile_context>

<pallas_src>
import jax
import jax.numpy as jnp
from jax.experimental import pallas as pl
from jax.experimental.pallas import tpu as pltpu

SUBLANE = 8


def _round_up(x, m):
    return (x + m - 1) // m * m


def decoder_kernel(z_ref, w1_ref, b1_ref, w2_ref, b2_ref, w3_ref, b3_ref, out_ref):
    prec = jax.lax.Precision.HIGHEST
    # Linear(latent, 64) + ReLU   — (TB, latent) x (latent, 64); Mosaic pads K/N internally.
    h1 = jnp.dot(z_ref[...], w1_ref[...],
                 preferred_element_type=jnp.float32, precision=prec)
    h1 = jnp.maximum(h1 + b1_ref[...], 0.0)
    # Linear(64, 128) + ReLU
    h2 = jnp.dot(h1, w2_ref[...],
                 preferred_element_type=jnp.float32, precision=prec)
    h2 = jnp.maximum(h2 + b2_ref[...], 0.0)
    # Linear(128, output_dim)
    y = jnp.dot(h2, w3_ref[...],
                preferred_element_type=jnp.float32, precision=prec) + b3_ref[...]
    out_ref[...] = y.astype(out_ref.dtype)


def _choose_batch_tiling(B, tile_b):
    # Pick the number of batch tiles first, then the tile size, so per-tile row
    # padding is < 8 rows.  Use >= 2 tiles when the batch allows, so the
    # "parallel" batch axis can be sharded across both v7x TensorCores.
    n_tiles = pl.cdiv(B, tile_b)
    if B >= 2 * SUBLANE:
        n_tiles = max(n_tiles, 2)
    tb = _round_up(pl.cdiv(B, n_tiles), SUBLANE)
    bp = n_tiles * tb
    return n_tiles, tb, bp


def decoder_forward(z, params, *, tile_b=1024):
    """z: (B, latent_dim) f32; params: dict of (in,out) weights + (1,out) biases."""
    w1, b1, w2, b2, w3, b3 = (params["w1"], params["b1"], params["w2"],
                              params["b2"], params["w3"], params["b3"])
    B, latent = z.shape
    h1_dim = w1.shape[1]
    h2_dim = w2.shape[1]
    out_dim = w3.shape[1]

    n_tiles, TB, Bp = _choose_batch_tiling(B, tile_b)

    # Only batch-row padding (< 8*n_tiles rows), never lane padding.
    if Bp != B:
        z_in = jnp.zeros((Bp, latent), z.dtype).at[:B, :].set(z)
    else:
        z_in = z

    grid = (n_tiles,)

    flops = 2 * Bp * (latent * h1_dim + h1_dim * h2_dim + h2_dim * out_dim)
    weight_bytes = 4 * (w1.size + b1.size + w2.size + b2.size + w3.size + b3.size)
    bytes_accessed = 4 * (Bp * latent + Bp * out_dim) + weight_bytes

    out_padded = pl.pallas_call(
        decoder_kernel,
        out_shape=jax.ShapeDtypeStruct((Bp, out_dim), z.dtype),
        grid=grid,
        in_specs=[
            # z: one batch tile per grid step; last dim == full array dim (contiguous DMA).
            pl.BlockSpec((TB, latent), lambda i: (i, 0)),
            # weights / biases: full-array blocks, constant index -> resident, DMA'd once.
            pl.BlockSpec((latent, h1_dim), lambda i: (0, 0)),
            pl.BlockSpec((1, h1_dim), lambda i: (0, 0)),
            pl.BlockSpec((h1_dim, h2_dim), lambda i: (0, 0)),
            pl.BlockSpec((1, h2_dim), lambda i: (0, 0)),
            pl.BlockSpec((h2_dim, out_dim), lambda i: (0, 0)),
            pl.BlockSpec((1, out_dim), lambda i: (0, 0)),
        ],
        # Output is emitted unpadded in the feature dim; accept masked stores.
        out_specs=pl.BlockSpec((TB, out_dim), lambda i: (i, 0)),
        compiler_params=pltpu.CompilerParams(
            dimension_semantics=("parallel",)),
        cost_estimate=pl.CostEstimate(
            flops=flops, transcendentals=0, bytes_accessed=bytes_accessed),
    )(z_in, w1, b1, w2, b2, w3, b3)

    return out_padded[:B] if Bp != B else out_padded


def init_params(key, latent_dim, output_dim):
    """Deterministic synthetic init (PyTorch-style uniform fan-in scaling)."""
    dims = [(latent_dim, 64), (64, 128), (128, output_dim)]
    params = {}
    for i, (fan_in, fan_out) in enumerate(dims, start=1):
        key, kw, kb = jax.random.split(key, 3)
        bound = 1.0 / jnp.sqrt(fan_in)
        # Stored as (in, out) — i.e. the transpose of PyTorch's (out, in).
        params[f"w{i}"] = jax.random.uniform(
            kw, (fan_in, fan_out), jnp.float32, -bound, bound)
        params[f"b{i}"] = jax.random.uniform(
            kb, (1, fan_out), jnp.float32, -bound, bound)
    return params


def reference_forward(z, params):
    h1 = jnp.maximum(z @ params["w1"] + params["b1"], 0.0)
    h2 = jnp.maximum(h1 @ params["w2"] + params["b2"], 0.0)
    return h2 @ params["w3"] + params["b3"]


if __name__ == "__main__":
    key = jax.random.PRNGKey(0)
    latent_dim, output_dim = 16, 32

    kz, kp, kz2 = jax.random.split(key, 3)
    params = init_params(kp, latent_dim, output_dim)

    fwd = jax.jit(decoder_forward)

    # Small primary check (matches module toy sizes): grid = 1, no batch padding.
    batch = 8
    z = jax.random.normal(kz, (batch, latent_dim), jnp.float32)
    out = jax.block_until_ready(fwd(z, params))
    ref = reference_forward(z, params)
    assert out.shape == (batch, output_dim)
    assert jnp.allclose(out, ref, atol=1e-4, rtol=1e-4), "mismatch vs JAX reference (B=8)"

    # Secondary check exercising batch tiling + <8-row padding (grid = 2, TB=264).
    batch2 = 520
    z2 = jax.random.normal(kz2, (batch2, latent_dim), jnp.float32)
    out2 = jax.block_until_ready(fwd(z2, params))
    ref2 = reference_forward(z2, params)
    assert out2.shape == (batch2, output_dim)
    assert jnp.allclose(out2, ref2, atol=1e-4, rtol=1e-4), "mismatch vs JAX reference (B=520)"

    print("KERNEL_OK")
</pallas_src>

<mosaic_0001>
module attributes {stable_mosaic.version = 11 : i64} {
  func.func @decoder_kernel(%arg0: i32, %arg1: memref<8x16xf32, #tpu.memory_space<vmem>>, %arg2: memref<16x64xf32, #tpu.memory_space<vmem>>, %arg3: memref<1x64xf32, #tpu.memory_space<vmem>>, %arg4: memref<64x128xf32, #tpu.memory_space<vmem>>, %arg5: memref<1x128xf32, #tpu.memory_space<vmem>>, %arg6: memref<128x32xf32, #tpu.memory_space<vmem>>, %arg7: memref<1x32xf32, #tpu.memory_space<vmem>>, %arg8: memref<8x32xf32, #tpu.memory_space<vmem>>) attributes {dimension_semantics = [#tpu.dimension_semantics<parallel>], iteration_bounds = array<i64: 1>, scalar_prefetch = 0 : i64, scratch_operands = 0 : i64, tpu.core_type = #tpu.core_type<tc>, window_params = [{transform_indices = @transform_0, window_bounds = array<i64: 8, 16>}, {pipeline_mode = #tpu.pipeline_mode<synchronous>, transform_indices = @transform_1, window_bounds = array<i64: 16, 64>}, {pipeline_mode = #tpu.pipeline_mode<synchronous>, transform_indices = @transform_2, window_bounds = array<i64: 1, 64>}, {pipeline_mode = #tpu.pipeline_mode<synchronous>, transform_indices = @transform_3, window_bounds = array<i64: 64, 128>}, {pipeline_mode = #tpu.pipeline_mode<synchronous>, transform_indices = @transform_4, window_bounds = array<i64: 1, 128>}, {pipeline_mode = #tpu.pipeline_mode<synchronous>, transform_indices = @transform_5, window_bounds = array<i64: 128, 32>}, {pipeline_mode = #tpu.pipeline_mode<synchronous>, transform_indices = @transform_6, window_bounds = array<i64: 1, 32>}, {transform_indices = @transform_7, window_bounds = array<i64: 8, 32>}]} {
    %c0 = arith.constant 0 : index
    %c0_0 = arith.constant 0 : index
    %0 = vector.load %arg1[%c0, %c0_0] : memref<8x16xf32, #tpu.memory_space<vmem>>, vector<8x16xf32>
    %c0_1 = arith.constant 0 : index
    %c0_2 = arith.constant 0 : index
    %1 = vector.load %arg2[%c0_1, %c0_2] : memref<16x64xf32, #tpu.memory_space<vmem>>, vector<16x64xf32>
    %cst = arith.constant dense<0.000000e+00> : vector<8x64xf32>
    %2 = tpu.matmul %0, %1, %cst {dimension_numbers = #tpu.dot_dimension_numbers<[1], [0], [0], [1], [0, 0, 1, 1], [], []>, precision = #tpu.contract_precision<fp32>} : vector<8x16xf32>, vector<16x64xf32>, vector<8x64xf32> -> vector<8x64xf32>
    %c0_3 = arith.constant 0 : index
    %c0_4 = arith.constant 0 : index
    %3 = vector.load %arg3[%c0_3, %c0_4] : memref<1x64xf32, #tpu.memory_space<vmem>>, vector<1x64xf32>
    %4 = vector.broadcast %3 : vector<1x64xf32> to vector<8x64xf32>
    %5 = arith.addf %2, %4 : vector<8x64xf32>
    %cst_5 = arith.constant 0.000000e+00 : f32
    %6 = vector.broadcast %cst_5 : f32 to vector<8x64xf32>
    %7 = arith.maximumf %5, %6 : vector<8x64xf32>
    %c0_6 = arith.constant 0 : index
    %c0_7 = arith.constant 0 : index
    %8 = vector.load %arg4[%c0_6, %c0_7] : memref<64x128xf32, #tpu.memory_space<vmem>>, vector<64x128xf32>
    %cst_8 = arith.constant dense<0.000000e+00> : vector<8x128xf32>
    %9 = tpu.matmul %7, %8, %cst_8 {dimension_numbers = #tpu.dot_dimension_numbers<[1], [0], [0], [1], [0, 0, 1, 1], [], []>, precision = #tpu.contract_precision<fp32>} : vector<8x64xf32>, vector<64x128xf32>, vector<8x128xf32> -> vector<8x128xf32>
    %c0_9 = arith.constant 0 : index
    %c0_10 = arith.constant 0 : index
    %10 = vector.load %arg5[%c0_9, %c0_10] : memref<1x128xf32, #tpu.memory_space<vmem>>, vector<1x128xf32>
    %11 = vector.broadcast %10 : vector<1x128xf32> to vector<8x128xf32>
    %12 = arith.addf %9, %11 : vector<8x128xf32>
    %cst_11 = arith.constant 0.000000e+00 : f32
    %13 = vector.broadcast %cst_11 : f32 to vector<8x128xf32>
    %14 = arith.maximumf %12, %13 : vector<8x128xf32>
    %c0_12 = arith.constant 0 : index
    %c0_13 = arith.constant 0 : index
    %15 = vector.load %arg6[%c0_12, %c0_13] : memref<128x32xf32, #tpu.memory_space<vmem>>, vector<128x32xf32>
    %cst_14 = arith.constant dense<0.000000e+00> : vector<8x32xf32>
    %16 = tpu.matmul %14, %15, %cst_14 {dimension_numbers = #tpu.dot_dimension_numbers<[1], [0], [0], [1], [0, 0, 1, 1], [], []>, precision = #tpu.contract_precision<fp32>} : vector<8x128xf32>, vector<128x32xf32>, vector<8x32xf32> -> vector<8x32xf32>
    %c0_15 = arith.constant 0 : index
    %c0_16 = arith.constant 0 : index
    %17 = vector.load %arg7[%c0_15, %c0_16] : memref<1x32xf32, #tpu.memory_space<vmem>>, vector<1x32xf32>
    %18 = vector.broadcast %17 : vector<1x32xf32> to vector<8x32xf32>
    %19 = arith.addf %16, %18 : vector<8x32xf32>
    %c0_17 = arith.constant 0 : index
    %c0_18 = arith.constant 0 : index
    %20 = vector.load %arg8[%c0_17, %c0_18] : memref<8x32xf32, #tpu.memory_space<vmem>>, vector<8x32xf32>
    tpu.vector_store %arg8[%c0_17, %c0_18], %19 {strides = array<i32>} : memref<8x32xf32, #tpu.memory_space<vmem>>, vector<8x32xf32>,
    return
  }
  func.func @transform_0(%arg0: i32) -> (i32, i32) {
    %c0_i32 = arith.constant 0 : i32
    %c0_i32_0 = arith.constant 0 : i32
    return %arg0, %c0_i32 : i32, i32
  }
  func.func @transform_1(%arg0: i32) -> (i32, i32) {
    %c0_i32 = arith.constant 0 : i32
    %c0_i32_0 = arith.constant 0 : i32
    %c0_i32_1 = arith.constant 0 : i32
    return %c0_i32, %c0_i32_0 : i32, i32
  }
  func.func @transform_2(%arg0: i32) -> (i32, i32) {
    %c0_i32 = arith.constant 0 : i32
    %c0_i32_0 = arith.constant 0 : i32
    %c0_i32_1 = arith.constant 0 : i32
    return %c0_i32, %c0_i32_0 : i32, i32
  }
  func.func @transform_3(%arg0: i32) -> (i32, i32) {
    %c0_i32 = arith.constant 0 : i32
    %c0_i32_0 = arith.constant 0 : i32
    %c0_i32_1 = arith.constant 0 : i32
    return %c0_i32, %c0_i32_0 : i32, i32
  }
  func.func @transform_4(%arg0: i32) -> (i32, i32) {
    %c0_i32 = arith.constant 0 : i32
    %c0_i32_0 = arith.constant 0 : i32
    %c0_i32_1 = arith.constant 0 : i32
    return %c0_i32, %c0_i32_0 : i32, i32
  }
  func.func @transform_5(%arg0: i32) -> (i32, i32) {
    %c0_i32 = arith.constant 0 : i32
    %c0_i32_0 = arith.constant 0 : i32
    %c0_i32_1 = arith.constant 0 : i32
    return %c0_i32, %c0_i32_0 : i32, i32
  }
  func.func @transform_6(%arg0: i32) -> (i32, i32) {
    %c0_i32 = arith.constant 0 : i32
    %c0_i32_0 = arith.constant 0 : i32
    %c0_i32_1 = arith.constant 0 : i32
    return %c0_i32, %c0_i32_0 : i32, i32
  }
  func.func @transform_7(%arg0: i32) -> (i32, i32) {
    %c0_i32 = arith.constant 0 : i32
    %c0_i32_0 = arith.constant 0 : i32
    return %arg0, %c0_i32 : i32, i32
  }
}

</mosaic_0001>

<llo_original>
// kernel: decoder_forward.1
$region0: #{decoder_forward.1}
  #allocation0 [shape = 'u32[]', space=smem, size = 0x4, offset = 0x4, fixed_abs, tag = 'smem constant byte address 0x4 - core index']
  #allocation1 [shape = 'u32[72,128]{1,0:T(1,128)}', space=vmem, size = 0x9000, scoped, tag = 'internal scratch']
  %s0 = inlined_call_operand.vmem [shape: f32[8,16], index: 0, kind: input, shape index: {}]
  %s1 = inlined_call_operand.vmem [shape: f32[16,64], index: 1, kind: input, shape index: {}]
  %s2 = inlined_call_operand.vmem [shape: f32[1,64], index: 2, kind: input, shape index: {}]
  %s3 = inlined_call_operand.vmem [shape: f32[64,128], index: 3, kind: input, shape index: {}]
  %s4 = inlined_call_operand.vmem [shape: f32[1,128], index: 4, kind: input, shape index: {}]
  %s5 = inlined_call_operand.vmem [shape: f32[128,32], index: 5, kind: input, shape index: {}]
  %s6 = inlined_call_operand.vmem [shape: f32[1,32], index: 6, kind: input, shape index: {}]
  %s7 = inlined_call_operand.hbm [shape: f32[8,32], index: 7, kind: output, shape index: {}]
  %s8 = sld [smem:[#allocation0]]
  $region38: #{decoder_forward.1} parent=0
    _
  %s10 = ssub.s32 1, %s8
  %s11 = scalar_select 0, %s10, %s8
  $region1: #{decoder_forward.1} parent=0
    #allocation2 [shape = 'u8[4096]{0}', space=vmem, size = 0x1000, scoped, tag = 'output window, operand 0, single buffered']
    #allocation3 [shape = 's32[1]{0}', space=sflag, size = 0x4, scoped, tag = 'scoped memory for decoder_forward.1']
    %12 = vsyncpa [#allocation3], 0
    // Predicated region
    $region2: #{decoder_forward.1} parent=1 // pred_check
      _
    $region3: #{decoder_forward.1} parent=1 // pred_check_branch
      %14 = sbr.rel (0) target = $region5
    $region4: #{decoder_forward.1} parent=1 // pred_region
      _
    $region5: #{decoder_forward.1} parent=1 // pred_fallthru
      _
    // Predicated region
    $region6: #{decoder_forward.1} parent=1 // pred_check
      _
    $region7: #{decoder_forward.1} parent=1 // pred_check_branch
      %16 = sbr.rel (0) target = $region9
    $region8: #{decoder_forward.1} parent=1 // pred_region
      _
    $region9: #{decoder_forward.1} parent=1 // pred_fallthru
      _
    // Predicated region
    $region10: #{decoder_forward.1} parent=1 // pred_check
      _
    $region11: #{decoder_forward.1} parent=1 // pred_check_branch
      %18 = sbr.rel (0) target = $region13
    $region12: #{decoder_forward.1} parent=1 // pred_region
      _
    $region13: #{decoder_forward.1} parent=1 // pred_fallthru
      _
    // Predicated region
    $region14: #{decoder_forward.1} parent=1 // pred_check
      _
    $region15: #{decoder_forward.1} parent=1 // pred_check_branch
      %20 = sbr.rel (0) target = $region17
    $region16: #{decoder_forward.1} parent=1 // pred_region
      _
    $region17: #{decoder_forward.1} parent=1 // pred_fallthru
      _
    // Predicated region
    $region18: #{decoder_forward.1} parent=1 // pred_check
      _
    $region19: #{decoder_forward.1} parent=1 // pred_check_branch
      %22 = sbr.rel (0) target = $region21
    $region20: #{decoder_forward.1} parent=1 // pred_region
      _
    $region21: #{decoder_forward.1} parent=1 // pred_fallthru
      _
    // Predicated region
    $region22: #{decoder_forward.1} parent=1 // pred_check
      _
    $region23: #{decoder_forward.1} parent=1 // pred_check_branch
      %24 = sbr.rel (0) target = $region25
    $region24: #{decoder_forward.1} parent=1 // pred_region
      _
    $region25: #{decoder_forward.1} parent=1 // pred_fallthru
      _
    // Predicated region
    $region26: #{decoder_forward.1} parent=1 // pred_check
      _
    $region27: #{decoder_forward.1} parent=1 // pred_check_branch
      %26 = sbr.rel (0) target = $region29
    $region28: #{decoder_forward.1} parent=1 // pred_region
      _
    $region29: #{decoder_forward.1} parent=1 // pred_fallthru
      _
    %v27 = vld [vmem:[%s0] sm:$0xff]
    %v28 = vld [vmem:[%s1] sm:$0xff]
    %v29 = vld [vmem:[%s1 + $0x8] sm:$0xff]
    %v30 = vld [vmem:[%s2] sm:$0x1]
    %v32 = vperm.slane %v30, 0
    %vm34 = vcmask 130048
    %v36 = vsel %vm34, %v27, 0
    %38 = vmatpush.msra.mxu0 0.0
    %39 = vmatpush.msra.mxu0 0.0
    %40 = vmatpush.msra.mxu0 0.0
    %41 = vmatpush.msra.mxu0 0.0
    %42 = vmatpush.msra.mxu0 0.0
    %43 = vmatpush.msra.mxu0 0.0
    %44 = vmatpush.msra.mxu0 0.0
    %45 = vmatpush.msra.mxu0 0.0
    %46 = vmatpush.msra.mxu0 0.0
    %47 = vmatpush.msra.mxu0 0.0
    %48 = vmatpush.msra.mxu0 0.0
    %49 = vmatpush.msra.mxu0 0.0
    %50 = vmatpush.msra.mxu0 0.0
    %51 = vmatpush.msra.mxu0 0.0
    %v52 = vand.u32 %v29, 4294901760
    %53 = vmatpush.msra.mxu0 %v52
    %v54 = vand.u32 %v28, 4294901760
    %55 = vmatpush.msra.mxu0 %v54
    %v56 = vand.u32 %v36, 4294901760
    %v57 = vsub.f32 %v36, %v56
    %v58 = vand.u32 %v57, 4294901760
    %v59 = vsub.f32 %v57, %v58
    %v60 = vand.u32 %v59, 4294901760
    %61 = vmatmul.f32.gmra.mxu0 %v60
    %v62 = vpop.f32.mrf.mxu0
    %v63 = vadd.f32 %v32, %v62
    %64 = vdwg.mxu0
    %65 = vmatpush.msra.mxu0 0.0
    %66 = vmatpush.msra.mxu0 0.0
    %67 = vmatpush.msra.mxu0 0.0
    %68 = vmatpush.msra.mxu0 0.0
    %69 = vmatpush.msra.mxu0 0.0
    %70 = vmatpush.msra.mxu0 0.0
    %71 = vmatpush.msra.mxu0 0.0
    %72 = vmatpush.msra.mxu0 0.0
    %73 = vmatpush.msra.mxu0 0.0
    %74 = vmatpush.msra.mxu0 0.0
    %75 = vmatpush.msra.mxu0 0.0
    %76 = vmatpush.msra.mxu0 0.0
    %77 = vmatpush.msra.mxu0 0.0
    %78 = vmatpush.msra.mxu0 0.0
    %v79 = vand.u32 %v29, 4294901760
    %v80 = vsub.f32 %v29, %v79
    %v81 = vand.u32 %v80, 4294901760
    %v82 = vsub.f32 %v80, %v81
    %v83 = vand.u32 %v82, 4294901760
    %84 = vmatpush.msra.mxu0 %v83
    %v85 = vand.u32 %v28, 4294901760
    %v86 = vsub.f32 %v28, %v85
    %v87 = vand.u32 %v86, 4294901760
    %v88 = vsub.f32 %v86, %v87
    %v89 = vand.u32 %v88, 4294901760
    %90 = vmatpush.msra.mxu0 %v89
    %v91 = vand.u32 %v36, 4294901760
    %92 = vmatmul.f32.gmra.mxu0 %v91
    %v93 = vpop.f32.mrf.mxu0
    %v94 = vadd.f32 %v63, %v93
    %95 = vdwg.mxu0
    %96 = vmatpush.msra.mxu0 0.0
    %97 = vmatpush.msra.mxu0 0.0
    %98 = vmatpush.msra.mxu0 0.0
    %99 = vmatpush.msra.mxu0 0.0
    %100 = vmatpush.msra.mxu0 0.0
    %101 = vmatpush.msra.mxu0 0.0
    %102 = vmatpush.msra.mxu0 0.0
    %103 = vmatpush.msra.mxu0 0.0
    %104 = vmatpush.msra.mxu0 0.0
    %105 = vmatpush.msra.mxu0 0.0
    %106 = vmatpush.msra.mxu0 0.0
    %107 = vmatpush.msra.mxu0 0.0
    %108 = vmatpush.msra.mxu0 0.0
    %109 = vmatpush.msra.mxu0 0.0
    %v110 = vand.u32 %v29, 4294901760
    %v111 = vsub.f32 %v29, %v110
    %112 = vmatpush.msra.mxu0 %v111
    %v113 = vand.u32 %v28, 4294901760
    %v114 = vsub.f32 %v28, %v113
    %115 = vmatpush.msra.mxu0 %v114
    %v116 = vand.u32 %v36, 4294901760
    %v117 = vsub.f32 %v36, %v116
    %118 = vmatmul.f32.gmra.mxu0 %v117
    %v119 = vpop.f32.mrf.mxu0
    %v120 = vadd.f32 %v94, %v119
    %121 = vdwg.mxu0
    %122 = vmatpush.msra.mxu0 0.0
    %123 = vmatpush.msra.mxu0 0.0
    %124 = vmatpush.msra.mxu0 0.0
    %125 = vmatpush.msra.mxu0 0.0
    %126 = vmatpush.msra.mxu0 0.0
    %127 = vmatpush.msra.mxu0 0.0
    %128 = vmatpush.msra.mxu0 0.0
    %129 = vmatpush.msra.mxu0 0.0
    %130 = vmatpush.msra.mxu0 0.0
    %131 = vmatpush.msra.mxu0 0.0
    %132 = vmatpush.msra.mxu0 0.0
    %133 = vmatpush.msra.mxu0 0.0
    %134 = vmatpush.msra.mxu0 0.0
    %135 = vmatpush.msra.mxu0 0.0
    %v136 = vand.u32 %v29, 4294901760
    %137 = vmatpush.msra.mxu0 %v136
    %v138 = vand.u32 %v28, 4294901760
    %139 = vmatpush.msra.mxu0 %v138
    %v140 = vand.u32 %v36, 4294901760
    %v141 = vsub.f32 %v36, %v140
    %v142 = vand.u32 %v141, 4294901760
    %143 = vmatmul.f32.gmra.mxu0 %v142
    %v144 = vpop.f32.mrf.mxu0
    %v145 = vadd.f32 %v120, %v144
    %146 = vdwg.mxu0
    %147 = vmatpush.msra.mxu0 0.0
    %148 = vmatpush.msra.mxu0 0.0
    %149 = vmatpush.msra.mxu0 0.0
    %150 = vmatpush.msra.mxu0 0.0
    %151 = vmatpush.msra.mxu0 0.0
    %152 = vmatpush.msra.mxu0 0.0
    %153 = vmatpush.msra.mxu0 0.0
    %154 = vmatpush.msra.mxu0 0.0
    %155 = vmatpush.msra.mxu0 0.0
    %156 = vmatpush.msra.mxu0 0.0
    %157 = vmatpush.msra.mxu0 0.0
    %158 = vmatpush.msra.mxu0 0.0
    %159 = vmatpush.msra.mxu0 0.0
    %160 = vmatpush.msra.mxu0 0.0
    %v161 = vand.u32 %v29, 4294901760
    %v162 = vsub.f32 %v29, %v161
    %v163 = vand.u32 %v162, 4294901760
    %164 = vmatpush.msra.mxu0 %v163
    %v165 = vand.u32 %v28, 4294901760
    %v166 = vsub.f32 %v28, %v165
    %v167 = vand.u32 %v166, 4294901760
    %168 = vmatpush.msra.mxu0 %v167
    %v169 = vand.u32 %v36, 4294901760
    %170 = vmatmul.f32.gmra.mxu0 %v169
    %v171 = vpop.f32.mrf.mxu0
    %v172 = vadd.f32 %v145, %v171
    %173 = vdwg.mxu0
    %174 = vmatpush.msra.mxu0 0.0
    %175 = vmatpush.msra.mxu0 0.0
    %176 = vmatpush.msra.mxu0 0.0
    %177 = vmatpush.msra.mxu0 0.0
    %178 = vmatpush.msra.mxu0 0.0
    %179 = vmatpush.msra.mxu0 0.0
    %180 = vmatpush.msra.mxu0 0.0
    %181 = vmatpush.msra.mxu0 0.0
    %182 = vmatpush.msra.mxu0 0.0
    %183 = vmatpush.msra.mxu0 0.0
    %184 = vmatpush.msra.mxu0 0.0
    %185 = vmatpush.msra.mxu0 0.0
    %186 = vmatpush.msra.mxu0 0.0
    %187 = vmatpush.msra.mxu0 0.0
    %v188 = vand.u32 %v29, 4294901760
    %189 = vmatpush.msra.mxu0 %v188
    %v190 = vand.u32 %v28, 4294901760
    %191 = vmatpush.msra.mxu0 %v190
    %v192 = vand.u32 %v36, 4294901760
    %193 = vmatmul.f32.gmra.mxu0 %v192
    %v194 = vpop.f32.mrf.mxu0
    %v195 = vadd.f32 %v172, %v194
    %196 = vdwg.mxu0
    %v197 = vmax.f32 %v195, 0.0
    %v198 = vld [vmem:[%s3] sm:$0xff]
    %v199 = vld [vmem:[%s3 + $0x8] sm:$0xff]
    %v200 = vld [vmem:[%s3 + $0x10] sm:$0xff]
    %v201 = vld [vmem:[%s3 + $0x18] sm:$0xff]
    %v202 = vld [vmem:[%s3 + $0x20] sm:$0xff]
    %v203 = vld [vmem:[%s3 + $0x28] sm:$0xff]
    %v204 = vld [vmem:[%s3 + $0x30] sm:$0xff]
    %v205 = vld [vmem:[%s3 + $0x38] sm:$0xff]
    %v206 = vld [vmem:[%s4] sm:$0x1]
    %v208 = vperm.slane %v206, 0
    %vm210 = vcmask 523264
    %v212 = vsel %vm210, %v197, 0
    %214 = vmatpush.msra.mxu0 0.0
    %215 = vmatpush.msra.mxu0 0.0
    %216 = vmatpush.msra.mxu0 0.0
    %217 = vmatpush.msra.mxu0 0.0
    %218 = vmatpush.msra.mxu0 0.0
    %219 = vmatpush.msra.mxu0 0.0
    %220 = vmatpush.msra.mxu0 0.0
    %221 = vmatpush.msra.mxu0 0.0
    %v222 = vand.u32 %v205, 4294901760
    %223 = vmatpush.msra.mxu0 %v222
    %v224 = vand.u32 %v204, 4294901760
    %225 = vmatpush.msra.mxu0 %v224
    %v226 = vand.u32 %v203, 4294901760
    %227 = vmatpush.msra.mxu0 %v226
    %v228 = vand.u32 %v202, 4294901760
    %229 = vmatpush.msra.mxu0 %v228
    %v230 = vand.u32 %v201, 4294901760
    %231 = vmatpush.msra.mxu0 %v230
    %v232 = vand.u32 %v200, 4294901760
    %233 = vmatpush.msra.mxu0 %v232
    %v234 = vand.u32 %v199, 4294901760
    %235 = vmatpush.msra.mxu0 %v234
    %v236 = vand.u32 %v198, 4294901760
    %237 = vmatpush.msra.mxu0 %v236
    %v238 = vand.u32 %v212, 4294901760
    %v239 = vsub.f32 %v212, %v238
    %v240 = vand.u32 %v239, 4294901760
    %v241 = vsub.f32 %v239, %v240
    %v242 = vand.u32 %v241, 4294901760
    %243 = vmatmul.f32.gmra.mxu0 %v242
    %v244 = vpop.f32.mrf.mxu0
    %v245 = vadd.f32 %v208, %v244
    %246 = vdwg.mxu0
    %247 = vmatpush.msra.mxu0 0.0
    %248 = vmatpush.msra.mxu0 0.0
    %249 = vmatpush.msra.mxu0 0.0
    %250 = vmatpush.msra.mxu0 0.0
    %251 = vmatpush.msra.mxu0 0.0
    %252 = vmatpush.msra.mxu0 0.0
    %253 = vmatpush.msra.mxu0 0.0
    %254 = vmatpush.msra.mxu0 0.0
    %v255 = vand.u32 %v205, 4294901760
    %v256 = vsub.f32 %v205, %v255
    %v257 = vand.u32 %v256, 4294901760
    %v258 = vsub.f32 %v256, %v257
    %v259 = vand.u32 %v258, 4294901760
    %260 = vmatpush.msra.mxu0 %v259
    %v261 = vand.u32 %v204, 4294901760
    %v262 = vsub.f32 %v204, %v261
    %v263 = vand.u32 %v262, 4294901760
    %v264 = vsub.f32 %v262, %v263
    %v265 = vand.u32 %v264, 4294901760
    %266 = vmatpush.msra.mxu0 %v265
    %v267 = vand.u32 %v203, 4294901760
    %v268 = vsub.f32 %v203, %v267
    %v269 = vand.u32 %v268, 4294901760
    %v270 = vsub.f32 %v268, %v269
    %v271 = vand.u32 %v270, 4294901760
    %272 = vmatpush.msra.mxu0 %v271
    %v273 = vand.u32 %v202, 4294901760
    %v274 = vsub.f32 %v202, %v273
    %v275 = vand.u32 %v274, 4294901760
    %v276 = vsub.f32 %v274, %v275
    %v277 = vand.u32 %v276, 4294901760
    %278 = vmatpush.msra.mxu0 %v277
    %v279 = vand.u32 %v201, 4294901760
    %v280 = vsub.f32 %v201, %v279
    %v281 = vand.u32 %v280, 4294901760
    %v282 = vsub.f32 %v280, %v281
    %v283 = vand.u32 %v282, 4294901760
    %284 = vmatpush.msra.mxu0 %v283
    %v285 = vand.u32 %v200, 4294901760
    %v286 = vsub.f32 %v200, %v285
    %v287 = vand.u32 %v286, 4294901760
    %v288 = vsub.f32 %v286, %v287
    %v289 = vand.u32 %v288, 4294901760
    %290 = vmatpush.msra.mxu0 %v289
    %v291 = vand.u32 %v199, 4294901760
    %v292 = vsub.f32 %v199, %v291
    %v293 = vand.u32 %v292, 4294901760
    %v294 = vsub.f32 %v292, %v293
    %v295 = vand.u32 %v294, 4294901760
    %296 = vmatpush.msra.mxu0 %v295
    %v297 = vand.u32 %v198, 4294901760
    %v298 = vsub.f32 %v198, %v297
    %v299 = vand.u32 %v298, 4294901760
    %v300 = vsub.f32 %v298, %v299
    %v301 = vand.u32 %v300, 4294901760
    %302 = vmatpush.msra.mxu0 %v301
    %v303 = vand.u32 %v212, 4294901760
    %304 = vmatmul.f32.gmra.mxu0 %v303
    %v305 = vpop.f32.mrf.mxu0
    %v306 = vadd.f32 %v245, %v305
    %307 = vdwg.mxu0
    %308 = vmatpush.msra.mxu0 0.0
    %309 = vmatpush.msra.mxu0 0.0
    %310 = vmatpush.msra.mxu0 0.0
    %311 = vmatpush.msra.mxu0 0.0
    %312 = vmatpush.msra.mxu0 0.0
    %313 = vmatpush.msra.mxu0 0.0
    %314 = vmatpush.msra.mxu0 0.0
    %315 = vmatpush.msra.mxu0 0.0
    %v316 = vand.u32 %v205, 4294901760
    %v317 = vsub.f32 %v205, %v316
    %318 = vmatpush.msra.mxu0 %v317
    %v319 = vand.u32 %v204, 4294901760
    %v320 = vsub.f32 %v204, %v319
    %321 = vmatpush.msra.mxu0 %v320
    %v322 = vand.u32 %v203, 4294901760
    %v323 = vsub.f32 %v203, %v322
    %324 = vmatpush.msra.mxu0 %v323
    %v325 = vand.u32 %v202, 4294901760
    %v326 = vsub.f32 %v202, %v325
    %327 = vmatpush.msra.mxu0 %v326
    %v328 = vand.u32 %v201, 4294901760
    %v329 = vsub.f32 %v201, %v328
    %330 = vmatpush.msra.mxu0 %v329
    %v331 = vand.u32 %v200, 4294901760
    %v332 = vsub.f32 %v200, %v331
    %333 = vmatpush.msra.mxu0 %v332
    %v334 = vand.u32 %v199, 4294901760
    %v335 = vsub.f32 %v199, %v334
    %336 = vmatpush.msra.mxu0 %v335
    %v337 = vand.u32 %v198, 4294901760
    %v338 = vsub.f32 %v198, %v337
    %339 = vmatpush.msra.mxu0 %v338
    %v340 = vand.u32 %v212, 4294901760
    %v341 = vsub.f32 %v212, %v340
    %342 = vmatmul.f32.gmra.mxu0 %v341
    %v343 = vpop.f32.mrf.mxu0
    %v344 = vadd.f32 %v306, %v343
    %345 = vdwg.mxu0
    %346 = vmatpush.msra.mxu0 0.0
    %347 = vmatpush.msra.mxu0 0.0
    %348 = vmatpush.msra.mxu0 0.0
    %349 = vmatpush.msra.mxu0 0.0
    %350 = vmatpush.msra.mxu0 0.0
    %351 = vmatpush.msra.mxu0 0.0
    %352 = vmatpush.msra.mxu0 0.0
    %353 = vmatpush.msra.mxu0 0.0
    %v354 = vand.u32 %v205, 4294901760
    %355 = vmatpush.msra.mxu0 %v354
    %v356 = vand.u32 %v204, 4294901760
    %357 = vmatpush.msra.mxu0 %v356
    %v358 = vand.u32 %v203, 4294901760
    %359 = vmatpush.msra.mxu0 %v358
    %v360 = vand.u32 %v202, 4294901760
    %361 = vmatpush.msra.mxu0 %v360
    %v362 = vand.u32 %v201, 4294901760
    %363 = vmatpush.msra.mxu0 %v362
    %v364 = vand.u32 %v200, 4294901760
    %365 = vmatpush.msra.mxu0 %v364
    %v366 = vand.u32 %v199, 4294901760
    %367 = vmatpush.msra.mxu0 %v366
    %v368 = vand.u32 %v198, 4294901760
    %369 = vmatpush.msra.mxu0 %v368
    %v370 = vand.u32 %v212, 4294901760
    %v371 = vsub.f32 %v212, %v370
    %v372 = vand.u32 %v371, 4294901760
    %373 = vmatmul.f32.gmra.mxu0 %v372
    %v374 = vpop.f32.mrf.mxu0
    %v375 = vadd.f32 %v344, %v374
    %376 = vdwg.mxu0
    %377 = vmatpush.msra.mxu0 0.0
    %378 = vmatpush.msra.mxu0 0.0
    %379 = vmatpush.msra.mxu0 0.0
    %380 = vmatpush.msra.mxu0 0.0
    %381 = vmatpush.msra.mxu0 0.0
    %382 = vmatpush.msra.mxu0 0.0
    %383 = vmatpush.msra.mxu0 0.0
    %384 = vmatpush.msra.mxu0 0.0
    %v385 = vand.u32 %v205, 4294901760
    %v386 = vsub.f32 %v205, %v385
    %v387 = vand.u32 %v386, 4294901760
    %388 = vmatpush.msra.mxu0 %v387
    %v389 = vand.u32 %v204, 4294901760
    %v390 = vsub.f32 %v204, %v389
    %v391 = vand.u32 %v390, 4294901760
    %392 = vmatpush.msra.mxu0 %v391
    %v393 = vand.u32 %v203, 4294901760
    %v394 = vsub.f32 %v203, %v393
    %v395 = vand.u32 %v394, 4294901760
    %396 = vmatpush.msra.mxu0 %v395
    %v397 = vand.u32 %v202, 4294901760
    %v398 = vsub.f32 %v202, %v397
    %v399 = vand.u32 %v398, 4294901760
    %400 = vmatpush.msra.mxu0 %v399
    %v401 = vand.u32 %v201, 4294901760
    %v402 = vsub.f32 %v201, %v401
    %v403 = vand.u32 %v402, 4294901760
    %404 = vmatpush.msra.mxu0 %v403
    %v405 = vand.u32 %v200, 4294901760
    %v406 = vsub.f32 %v200, %v405
    %v407 = vand.u32 %v406, 4294901760
    %408 = vmatpush.msra.mxu0 %v407
    %v409 = vand.u32 %v199, 4294901760
    %v410 = vsub.f32 %v199, %v409
    %v411 = vand.u32 %v410, 4294901760
    %412 = vmatpush.msra.mxu0 %v411
    %v413 = vand.u32 %v198, 4294901760
    %v414 = vsub.f32 %v198, %v413
    %v415 = vand.u32 %v414, 4294901760
    %416 = vmatpush.msra.mxu0 %v415
    %v417 = vand.u32 %v212, 4294901760
    %418 = vmatmul.f32.gmra.mxu0 %v417
    %v419 = vpop.f32.mrf.mxu0
    %v420 = vadd.f32 %v375, %v419
    %421 = vdwg.mxu0
    %422 = vmatpush.msra.mxu0 0.0
    %423 = vmatpush.msra.mxu0 0.0
    %424 = vmatpush.msra.mxu0 0.0
    %425 = vmatpush.msra.mxu0 0.0
    %426 = vmatpush.msra.mxu0 0.0
    %427 = vmatpush.msra.mxu0 0.0
    %428 = vmatpush.msra.mxu0 0.0
    %429 = vmatpush.msra.mxu0 0.0
    %v430 = vand.u32 %v205, 4294901760
    %431 = vmatpush.msra.mxu0 %v430
    %v432 = vand.u32 %v204, 4294901760
    %433 = vmatpush.msra.mxu0 %v432
    %v434 = vand.u32 %v203, 4294901760
    %435 = vmatpush.msra.mxu0 %v434
    %v436 = vand.u32 %v202, 4294901760
    %437 = vmatpush.msra.mxu0 %v436
    %v438 = vand.u32 %v201, 4294901760
    %439 = vmatpush.msra.mxu0 %v438
    %v440 = vand.u32 %v200, 4294901760
    %441 = vmatpush.msra.mxu0 %v440
    %v442 = vand.u32 %v199, 4294901760
    %443 = vmatpush.msra.mxu0 %v442
    %v444 = vand.u32 %v198, 4294901760
    %445 = vmatpush.msra.mxu0 %v444
    %v446 = vand.u32 %v212, 4294901760
    %447 = vmatmul.f32.gmra.mxu0 %v446
    %v448 = vpop.f32.mrf.mxu0
    %v449 = vadd.f32 %v420, %v448
    %450 = vdwg.mxu0
    %v451 = vmax.f32 %v449, 0.0
    %v452 = vld [vmem:[%s5] sm:$0xff]
    %v453 = vld [vmem:[%s5 + $0x8] sm:$0xff]
    %v454 = vld [vmem:[%s5 + $0x10] sm:$0xff]
    %v455 = vld [vmem:[%s5 + $0x18] sm:$0xff]
    %v456 = vld [vmem:[%s5 + $0x20] sm:$0xff]
    %v457 = vld [vmem:[%s5 + $0x28] sm:$0xff]
    %v458 = vld [vmem:[%s5 + $0x30] sm:$0xff]
    %v459 = vld [vmem:[%s5 + $0x38] sm:$0xff]
    %v460 = vld [vmem:[%s5 + $0x40] sm:$0xff]
    %v461 = vld [vmem:[%s5 + $0x48] sm:$0xff]
    %v462 = vld [vmem:[%s5 + $0x50] sm:$0xff]
    %v463 = vld [vmem:[%s5 + $0x58] sm:$0xff]
    %v464 = vld [vmem:[%s5 + $0x60] sm:$0xff]
    %v465 = vld [vmem:[%s5 + $0x68] sm:$0xff]
    %v466 = vld [vmem:[%s5 + $0x70] sm:$0xff]
    %v467 = vld [vmem:[%s5 + $0x78] sm:$0xff]
    %v468 = vld [vmem:[%s6] sm:$0x1]
    %v470 = vperm.slane %v468, 0
    %v472 = vand.u32 %v467, 4294901760
    %473 = vmatpush.msra.mxu0 %v472
    %v474 = vand.u32 %v466, 4294901760
    %475 = vmatpush.msra.mxu0 %v474
    %v476 = vand.u32 %v465, 4294901760
    %477 = vmatpush.msra.mxu0 %v476
    %v478 = vand.u32 %v464, 4294901760
    %479 = vmatpush.msra.mxu0 %v478
    %v480 = vand.u32 %v463, 4294901760
    %481 = vmatpush.msra.mxu0 %v480
    %v482 = vand.u32 %v462, 4294901760
    %483 = vmatpush.msra.mxu0 %v482
    %v484 = vand.u32 %v461, 4294901760
    %485 = vmatpush.msra.mxu0 %v484
    %v486 = vand.u32 %v460, 4294901760
    %487 = vmatpush.msra.mxu0 %v486
    %v488 = vand.u32 %v459, 4294901760
    %489 = vmatpush.msra.mxu0 %v488
    %v490 = vand.u32 %v458, 4294901760
    %491 = vmatpush.msra.mxu0 %v490
    %v492 = vand.u32 %v457, 4294901760
    %493 = vmatpush.msra.mxu0 %v492
    %v494 = vand.u32 %v456, 4294901760
    %495 = vmatpush.msra.mxu0 %v494
    %v496 = vand.u32 %v455, 4294901760
    %497 = vmatpush.msra.mxu0 %v496
    %v498 = vand.u32 %v454, 4294901760
    %499 = vmatpush.msra.mxu0 %v498
    %v500 = vand.u32 %v453, 4294901760
    %501 = vmatpush.msra.mxu0 %v500
    %v502 = vand.u32 %v452, 4294901760
    %503 = vmatpush.msra.mxu0 %v502
    %v504 = vand.u32 %v451, 4294901760
    %v505 = vsub.f32 %v451, %v504
    %v506 = vand.u32 %v505, 4294901760
    %v507 = vsub.f32 %v505, %v506
    %v508 = vand.u32 %v507, 4294901760
    %509 = vmatmul.f32.gmra.mxu0 %v508
    %v510 = vpop.f32.mrf.mxu0
    %v511 = vadd.f32 %v470, %v510
    %512 = vdwg.mxu0
    %v513 = vand.u32 %v467, 4294901760
    %v514 = vsub.f32 %v467, %v513
    %v515 = vand.u32 %v514, 4294901760
    %v516 = vsub.f32 %v514, %v515
    %v517 = vand.u32 %v516, 4294901760
    %518 = vmatpush.msra.mxu0 %v517
    %v519 = vand.u32 %v466, 4294901760
    %v520 = vsub.f32 %v466, %v519
    %v521 = vand.u32 %v520, 4294901760
    %v522 = vsub.f32 %v520, %v521
    %v523 = vand.u32 %v522, 4294901760
    %524 = vmatpush.msra.mxu0 %v523
    %v525 = vand.u32 %v465, 4294901760
    %v526 = vsub.f32 %v465, %v525
    %v527 = vand.u32 %v526, 4294901760
    %v528 = vsub.f32 %v526, %v527
    %v529 = vand.u32 %v528, 4294901760
    %530 = vmatpush.msra.mxu0 %v529
    %v531 = vand.u32 %v464, 4294901760
    %v532 = vsub.f32 %v464, %v531
    %v533 = vand.u32 %v532, 4294901760
    %v534 = vsub.f32 %v532, %v533
    %v535 = vand.u32 %v534, 4294901760
    %536 = vmatpush.msra.mxu0 %v535
    %v537 = vand.u32 %v463, 4294901760
    %v538 = vsub.f32 %v463, %v537
    %v539 = vand.u32 %v538, 4294901760
    %v540 = vsub.f32 %v538, %v539
    %v541 = vand.u32 %v540, 4294901760
    %542 = vmatpush.msra.mxu0 %v541
    %v543 = vand.u32 %v462, 4294901760
    %v544 = vsub.f32 %v462, %v543
    %v545 = vand.u32 %v544, 4294901760
    %v546 = vsub.f32 %v544, %v545
    %v547 = vand.u32 %v546, 4294901760
    %548 = vmatpush.msra.mxu0 %v547
    %v549 = vand.u32 %v461, 4294901760
    %v550 = vsub.f32 %v461, %v549
    %v551 = vand.u32 %v550, 4294901760
    %v552 = vsub.f32 %v550, %v551
    %v553 = vand.u32 %v552, 4294901760
    %554 = vmatpush.msra.mxu0 %v553
    %v555 = vand.u32 %v460, 4294901760
    %v556 = vsub.f32 %v460, %v555
    %v557 = vand.u32 %v556, 4294901760
    %v558 = vsub.f32 %v556, %v557
    %v559 = vand.u32 %v558, 4294901760
    %560 = vmatpush.msra.mxu0 %v559
    %v561 = vand.u32 %v459, 4294901760
    %v562 = vsub.f32 %v459, %v561
    %v563 = vand.u32 %v562, 4294901760
    %v564 = vsub.f32 %v562, %v563
    %v565 = vand.u32 %v564, 4294901760
    %566 = vmatpush.msra.mxu0 %v565
    %v567 = vand.u32 %v458, 4294901760
    %v568 = vsub.f32 %v458, %v567
    %v569 = vand.u32 %v568, 4294901760
    %v570 = vsub.f32 %v568, %v569
    %v571 = vand.u32 %v570, 4294901760
    %572 = vmatpush.msra.mxu0 %v571
    %v573 = vand.u32 %v457, 4294901760
    %v574 = vsub.f32 %v457, %v573
    %v575 = vand.u32 %v574, 4294901760
    %v576 = vsub.f32 %v574, %v575
    %v577 = vand.u32 %v576, 4294901760
    %578 = vmatpush.msra.mxu0 %v577
    %v579 = vand.u32 %v456, 4294901760
    %v580 = vsub.f32 %v456, %v579
    %v581 = vand.u32 %v580, 4294901760
    %v582 = vsub.f32 %v580, %v581
    %v583 = vand.u32 %v582, 4294901760
    %584 = vmatpush.msra.mxu0 %v583
    %v585 = vand.u32 %v455, 4294901760
    %v586 = vsub.f32 %v455, %v585
    %v587 = vand.u32 %v586, 4294901760
    %v588 = vsub.f32 %v586, %v587
    %v589 = vand.u32 %v588, 4294901760
    %590 = vmatpush.msra.mxu0 %v589
    %v591 = vand.u32 %v454, 4294901760
    %v592 = vsub.f32 %v454, %v591
    %v593 = vand.u32 %v592, 4294901760
    %v594 = vsub.f32 %v592, %v593
    %v595 = vand.u32 %v594, 4294901760
    %596 = vmatpush.msra.mxu0 %v595
    %v597 = vand.u32 %v453, 4294901760
    %v598 = vsub.f32 %v453, %v597
    %v599 = vand.u32 %v598, 4294901760
    %v600 = vsub.f32 %v598, %v599
    %v601 = vand.u32 %v600, 4294901760
    %602 = vmatpush.msra.mxu0 %v601
    %v603 = vand.u32 %v452, 4294901760
    %v604 = vsub.f32 %v452, %v603
    %v605 = vand.u32 %v604, 4294901760
    %v606 = vsub.f32 %v604, %v605
    %v607 = vand.u32 %v606, 4294901760
    %608 = vmatpush.msra.mxu0 %v607
    %v609 = vand.u32 %v451, 4294901760
    %610 = vmatmul.f32.gmra.mxu0 %v609
    %v611 = vpop.f32.mrf.mxu0
    %v612 = vadd.f32 %v511, %v611
    %613 = vdwg.mxu0
    %v614 = vand.u32 %v467, 4294901760
    %v615 = vsub.f32 %v467, %v614
    %616 = vmatpush.msra.mxu0 %v615
    %v617 = vand.u32 %v466, 4294901760
    %v618 = vsub.f32 %v466, %v617
    %619 = vmatpush.msra.mxu0 %v618
    %v620 = vand.u32 %v465, 4294901760
    %v621 = vsub.f32 %v465, %v620
    %622 = vmatpush.msra.mxu0 %v621
    %v623 = vand.u32 %v464, 4294901760
    %v624 = vsub.f32 %v464, %v623
    %625 = vmatpush.msra.mxu0 %v624
    %v626 = vand.u32 %v463, 4294901760
    %v627 = vsub.f32 %v463, %v626
    %628 = vmatpush.msra.mxu0 %v627
    %v629 = vand.u32 %v462, 4294901760
    %v630 = vsub.f32 %v462, %v629
    %631 = vmatpush.msra.mxu0 %v630
    %v632 = vand.u32 %v461, 4294901760
    %v633 = vsub.f32 %v461, %v632
    %634 = vmatpush.msra.mxu0 %v633
    %v635 = vand.u32 %v460, 4294901760
    %v636 = vsub.f32 %v460, %v635
    %637 = vmatpush.msra.mxu0 %v636
    %v638 = vand.u32 %v459, 4294901760
    %v639 = vsub.f32 %v459, %v638
    %640 = vmatpush.msra.mxu0 %v639
    %v641 = vand.u32 %v458, 4294901760
    %v642 = vsub.f32 %v458, %v641
    %643 = vmatpush.msra.mxu0 %v642
    %v644 = vand.u32 %v457, 4294901760
    %v645 = vsub.f32 %v457, %v644
    %646 = vmatpush.msra.mxu0 %v645
    %v647 = vand.u32 %v456, 4294901760
    %v648 = vsub.f32 %v456, %v647
    %649 = vmatpush.msra.mxu0 %v648
    %v650 = vand.u32 %v455, 4294901760
    %v651 = vsub.f32 %v455, %v650
    %652 = vmatpush.msra.mxu0 %v651
    %v653 = vand.u32 %v454, 4294901760
    %v654 = vsub.f32 %v454, %v653
    %655 = vmatpush.msra.mxu0 %v654
    %v656 = vand.u32 %v453, 4294901760
    %v657 = vsub.f32 %v453, %v656
    %658 = vmatpush.msra.mxu0 %v657
    %v659 = vand.u32 %v452, 4294901760
    %v660 = vsub.f32 %v452, %v659
    %661 = vmatpush.msra.mxu0 %v660
    %v662 = vand.u32 %v451, 4294901760
    %v663 = vsub.f32 %v451, %v662
    %664 = vmatmul.f32.gmra.mxu0 %v663
    %v665 = vpop.f32.mrf.mxu0
    %v666 = vadd.f32 %v612, %v665
    %667 = vdwg.mxu0
    %v668 = vand.u32 %v467, 4294901760
    %669 = vmatpush.msra.mxu0 %v668
    %v670 = vand.u32 %v466, 4294901760
    %671 = vmatpush.msra.mxu0 %v670
    %v672 = vand.u32 %v465, 4294901760
    %673 = vmatpush.msra.mxu0 %v672
    %v674 = vand.u32 %v464, 4294901760
    %675 = vmatpush.msra.mxu0 %v674
    %v676 = vand.u32 %v463, 4294901760
    %677 = vmatpush.msra.mxu0 %v676
    %v678 = vand.u32 %v462, 4294901760
    %679 = vmatpush.msra.mxu0 %v678
    %v680 = vand.u32 %v461, 4294901760
    %681 = vmatpush.msra.mxu0 %v680
    %v682 = vand.u32 %v460, 4294901760
    %683 = vmatpush.msra.mxu0 %v682
    %v684 = vand.u32 %v459, 4294901760
    %685 = vmatpush.msra.mxu0 %v684
    %v686 = vand.u32 %v458, 4294901760
    %687 = vmatpush.msra.mxu0 %v686
    %v688 = vand.u32 %v457, 4294901760
    %689 = vmatpush.msra.mxu0 %v688
    %v690 = vand.u32 %v456, 4294901760
    %691 = vmatpush.msra.mxu0 %v690
    %v692 = vand.u32 %v455, 4294901760
    %693 = vmatpush.msra.mxu0 %v692
    %v694 = vand.u32 %v454, 4294901760
    %695 = vmatpush.msra.mxu0 %v694
    %v696 = vand.u32 %v453, 4294901760
    %697 = vmatpush.msra.mxu0 %v696
    %v698 = vand.u32 %v452, 4294901760
    %699 = vmatpush.msra.mxu0 %v698
    %v700 = vand.u32 %v451, 4294901760
    %v701 = vsub.f32 %v451, %v700
    %v702 = vand.u32 %v701, 4294901760
    %703 = vmatmul.f32.gmra.mxu0 %v702
    %v704 = vpop.f32.mrf.mxu0
    %v705 = vadd.f32 %v666, %v704
    %706 = vdwg.mxu0
    %v707 = vand.u32 %v467, 4294901760
    %v708 = vsub.f32 %v467, %v707
    %v709 = vand.u32 %v708, 4294901760
    %710 = vmatpush.msra.mxu0 %v709
    %v711 = vand.u32 %v466, 4294901760
    %v712 = vsub.f32 %v466, %v711
    %v713 = vand.u32 %v712, 4294901760
    %714 = vmatpush.msra.mxu0 %v713
    %v715 = vand.u32 %v465, 4294901760
    %v716 = vsub.f32 %v465, %v715
    %v717 = vand.u32 %v716, 4294901760
    %718 = vmatpush.msra.mxu0 %v717
    %v719 = vand.u32 %v464, 4294901760
    %v720 = vsub.f32 %v464, %v719
    %v721 = vand.u32 %v720, 4294901760
    %722 = vmatpush.msra.mxu0 %v721
    %v723 = vand.u32 %v463, 4294901760
    %v724 = vsub.f32 %v463, %v723
    %v725 = vand.u32 %v724, 4294901760
    %726 = vmatpush.msra.mxu0 %v725
    %v727 = vand.u32 %v462, 4294901760
    %v728 = vsub.f32 %v462, %v727
    %v729 = vand.u32 %v728, 4294901760
    %730 = vmatpush.msra.mxu0 %v729
    %v731 = vand.u32 %v461, 4294901760
    %v732 = vsub.f32 %v461, %v731
    %v733 = vand.u32 %v732, 4294901760
    %734 = vmatpush.msra.mxu0 %v733
    %v735 = vand.u32 %v460, 4294901760
    %v736 = vsub.f32 %v460, %v735
    %v737 = vand.u32 %v736, 4294901760
    %738 = vmatpush.msra.mxu0 %v737
    %v739 = vand.u32 %v459, 4294901760
    %v740 = vsub.f32 %v459, %v739
    %v741 = vand.u32 %v740, 4294901760
    %742 = vmatpush.msra.mxu0 %v741
    %v743 = vand.u32 %v458, 4294901760
    %v744 = vsub.f32 %v458, %v743
    %v745 = vand.u32 %v744, 4294901760
    %746 = vmatpush.msra.mxu0 %v745
    %v747 = vand.u32 %v457, 4294901760
    %v748 = vsub.f32 %v457, %v747
    %v749 = vand.u32 %v748, 4294901760
    %750 = vmatpush.msra.mxu0 %v749
    %v751 = vand.u32 %v456, 4294901760
    %v752 = vsub.f32 %v456, %v751
    %v753 = vand.u32 %v752, 4294901760
    %754 = vmatpush.msra.mxu0 %v753
    %v755 = vand.u32 %v455, 4294901760
    %v756 = vsub.f32 %v455, %v755
    %v757 = vand.u32 %v756, 4294901760
    %758 = vmatpush.msra.mxu0 %v757
    %v759 = vand.u32 %v454, 4294901760
    %v760 = vsub.f32 %v454, %v759
    %v761 = vand.u32 %v760, 4294901760
    %762 = vmatpush.msra.mxu0 %v761
    %v763 = vand.u32 %v453, 4294901760
    %v764 = vsub.f32 %v453, %v763
    %v765 = vand.u32 %v764, 4294901760
    %766 = vmatpush.msra.mxu0 %v765
    %v767 = vand.u32 %v452, 4294901760
    %v768 = vsub.f32 %v452, %v767
    %v769 = vand.u32 %v768, 4294901760
    %770 = vmatpush.msra.mxu0 %v769
    %v771 = vand.u32 %v451, 4294901760
    %772 = vmatmul.f32.gmra.mxu0 %v771
    %v773 = vpop.f32.mrf.mxu0
    %v774 = vadd.f32 %v705, %v773
    %775 = vdwg.mxu0
    %v776 = vand.u32 %v467, 4294901760
    %777 = vmatpush.msra.mxu0 %v776
    %v778 = vand.u32 %v466, 4294901760
    %779 = vmatpush.msra.mxu0 %v778
    %v780 = vand.u32 %v465, 4294901760
    %781 = vmatpush.msra.mxu0 %v780
    %v782 = vand.u32 %v464, 4294901760
    %783 = vmatpush.msra.mxu0 %v782
    %v784 = vand.u32 %v463, 4294901760
    %785 = vmatpush.msra.mxu0 %v784
    %v786 = vand.u32 %v462, 4294901760
    %787 = vmatpush.msra.mxu0 %v786
    %v788 = vand.u32 %v461, 4294901760
    %789 = vmatpush.msra.mxu0 %v788
    %v790 = vand.u32 %v460, 4294901760
    %791 = vmatpush.msra.mxu0 %v790
    %v792 = vand.u32 %v459, 4294901760
    %793 = vmatpush.msra.mxu0 %v792
    %v794 = vand.u32 %v458, 4294901760
    %795 = vmatpush.msra.mxu0 %v794
    %v796 = vand.u32 %v457, 4294901760
    %797 = vmatpush.msra.mxu0 %v796
    %v798 = vand.u32 %v456, 4294901760
    %799 = vmatpush.msra.mxu0 %v798
    %v800 = vand.u32 %v455, 4294901760
    %801 = vmatpush.msra.mxu0 %v800
    %v802 = vand.u32 %v454, 4294901760
    %803 = vmatpush.msra.mxu0 %v802
    %v804 = vand.u32 %v453, 4294901760
    %805 = vmatpush.msra.mxu0 %v804
    %v806 = vand.u32 %v452, 4294901760
    %807 = vmatpush.msra.mxu0 %v806
    %v808 = vand.u32 %v451, 4294901760
    %809 = vmatmul.f32.gmra.mxu0 %v808
    %v810 = vpop.f32.mrf.mxu0
    %v811 = vadd.f32 %v774, %v810
    %812 = vdwg.mxu0
    %vm813 = vcmask 261120
    %814 = vst.msk [vmem:[#allocation2] sm:$0xff] %vm813, %v811
    // Predicated region
    $region30: #{decoder_forward.1} parent=1 // pred_check
      _
    $region31: #{decoder_forward.1} parent=1 // pred_check_branch
      %816 = sbr.rel (0) target = $region33
    $region32: #{decoder_forward.1} parent=1 // pred_region
      %818 = vsyncadd [#allocation3], 0
      %s820 = sshll.u32 [#allocation2], 4
      %s821 = int_to_ptr.vmem [resolvable:$true] %s820
      %s822 = sshll.u32 %s7, 4
      %s823 = int_to_ptr.hbm [resolvable:$true] %s822
      %825 = dma.vmem_to_hbm [thread:$0]  %s821, 128, %s823, [#allocation3]
    $region33: #{decoder_forward.1} parent=1 // pred_fallthru
      _
    // Predicated region
    $region34: #{decoder_forward.1} parent=1 // pred_check
      _
    $region35: #{decoder_forward.1} parent=1 // pred_check_branch
      %827 = sbr.rel (0) target = $region37
    $region36: #{decoder_forward.1} parent=1 // pred_region
      %829 = dma.done [#allocation3], 128
    $region37: #{decoder_forward.1} parent=1 // pred_fallthru
      _
    %830 = vsyncpa [#allocation3], 1

</llo_original>
